<compile_context>
chip_gen: v5e
topology: v5e:2x2
jax: 0.10.0
libtpu: 0.0.40
codegen_flags: <defaults>
</compile_context>

<pallas_src>
import functools

import jax
import jax.numpy as jnp
from jax.experimental import pallas as pl
from jax.experimental.pallas import tpu as pltpu

_LANE = 128
_SUBLANE_BY_ITEMSIZE = {4: 8, 2: 16, 1: 32}    # packed sublane tile height per dtype width
_BLOCK_BYTES_BUDGET = 4 * 1024 * 1024           # per block; ~4x resident (in+out, double-buffered)
_VMEM_LIMIT_BYTES = 24 * 1024 * 1024            # cap: safe on v7x (64 MiB physical VMEM)
_MAX_LANE_COLS = 32768                          # keep the flattened last dim reasonable


def _copy_kernel(x_ref, o_ref):
    # Placeholder hot path: the base class defines no compute, so this is a
    # pure VMEM pass-through.  A concrete subclass's features/classifier would
    # replace it with fused matmul/conv tiles (f32 VMEM-scratch accumulator,
    # K-axis last + "arbitrary", M/N "parallel"; 256-wide MXU tiles on
    # v6e/v7x, 128 on v5e; note v7x MXU has no int8 path -- fp8 only).
    o_ref[...] = x_ref[...]


def _sublane(itemsize):
    return _SUBLANE_BY_ITEMSIZE.get(itemsize, 8)


def _lane_dense_2d(total, itemsize):
    """Factor `total` elements into (rows, cols) with cols a multiple of 128.

    Returns None when no lane-dense factorization exists; the caller then
    skips the kernel (identity needs no compute anyway)."""
    if total % _LANE != 0:
        return None
    sub = _sublane(itemsize)
    cols = _LANE
    # Widen the lane dim while rows stays at least one packed sublane tile.
    while (total % (cols * 2) == 0
           and total // (cols * 2) >= sub
           and cols * 2 <= _MAX_LANE_COLS):
        cols *= 2
    return total // cols, cols


def _choose_blocks(rows, cols, itemsize):
    """Pick (block_rows, block_cols) under the VMEM budget.

    block_cols is a multiple of 128 (or the full extent); block_rows is a
    multiple of the dtype's packed sublane tile (or the full extent)."""
    sub = _sublane(itemsize)

    # Column block: full cols when small; otherwise the widest 128-multiple
    # such that one sublane-tile-high slice still fits the budget.
    max_block_cols = max(_LANE, (_BLOCK_BYTES_BUDGET // (sub * itemsize)) // _LANE * _LANE)
    block_cols = cols if cols <= max_block_cols else max_block_cols

    # Row block: biggest multiple of `sub` that keeps the block within budget.
    row_bytes = block_cols * itemsize
    max_block_rows = max(sub, (_BLOCK_BYTES_BUDGET // max(row_bytes, 1)) // sub * sub)
    block_rows = rows if rows <= max_block_rows else max_block_rows

    # v7x megacore: if the whole row extent fits one block but can be split
    # into >= 2 full sublane tiles, split it so the 2nd TensorCore gets work
    # (neutral on v5e/v6e: 1 TC per chip).
    if block_rows == rows and rows >= 2 * sub:
        block_rows = max(sub, ((rows + 1) // 2) // sub * sub)

    return block_rows, block_cols


def _identity_pallas_2d(x2d):
    """Tiled, lane-dense, input-aliased identity pass over a 2-D array."""
    rows, cols = x2d.shape
    itemsize = jnp.dtype(x2d.dtype).itemsize
    block_rows, block_cols = _choose_blocks(rows, cols, itemsize)
    grid = (pl.cdiv(rows, block_rows), pl.cdiv(cols, block_cols))
    # TODO(synk): when rows/cols aren't multiples of the block, TPU Pallas
    # clamps the last block so it overlaps earlier elements.  Fine for an
    # idempotent copy; handle remainders explicitly before adding
    # accumulation-style compute here.
    return pl.pallas_call(
        _copy_kernel,
        out_shape=jax.ShapeDtypeStruct((rows, cols), x2d.dtype),
        grid=grid,
        in_specs=[pl.BlockSpec((block_rows, block_cols), lambda i, j: (i, j))],
        out_specs=pl.BlockSpec((block_rows, block_cols), lambda i, j: (i, j)),
        # Identity stage: alias the output onto the (donated) input buffer.
        input_output_aliases={0: 0},
        compiler_params=pltpu.CompilerParams(
            dimension_semantics=("parallel", "parallel"),
            vmem_limit_bytes=_VMEM_LIMIT_BYTES,
        ),
    )(x2d)


@functools.partial(jax.jit, donate_argnums=0)
def _pallas_feature_stage(x_nchw):
    """Fusion point a concrete subclass would fill with real compute.

    The argument is donated so the pallas input_output_aliases can genuinely
    reuse the buffer instead of triggering an XLA defensive copy."""
    shape = x_nchw.shape
    total = 1
    for d in shape:
        total *= d
    factor = _lane_dense_2d(total, jnp.dtype(x_nchw.dtype).itemsize)
    if factor is None:
        # TODO(synk): no 128-multiple factorization (e.g. odd element counts);
        # the identity stage needs no compute, so skip the kernel rather than
        # pad and relaunch.
        return x_nchw
    rows, cols = factor
    y2d = _identity_pallas_2d(x_nchw.reshape(rows, cols))
    return y2d.reshape(shape)


class ConditionalAdaptiveJAX:
    """JAX/Pallas port of salad.models.base.ConditionalAdaptive."""

    def __init__(self):
        # Matches the PyTorch __init__: both submodules are undefined (None)
        # and the module declares no parameters.
        self.features = None
        self.classifier = None

    def forward(self):
        # Reference forward() body is `pass` -> returns None.  Reproduced
        # exactly.
        # TODO(synk): abstract base class with an empty forward; a concrete
        # subclass would define features/classifier and route them through
        # _pallas_feature_stage with fused MXU tiles.
        return None

    def placeholder_feature_pass(self, x):
        # features is None -> true identity: skip the pallas_call entirely
        # (no launch cost, no HBM round trip for zero compute).
        if self.features is None and self.classifier is None:
            return x
        return _pallas_feature_stage(x)


if __name__ == "__main__":
    key = jax.random.PRNGKey(0)
    # Small NCHW input consistent with a conv-style model: batch=2, C=4, 16x16.
    x = jax.random.normal(key, (2, 4, 16, 16), dtype=jnp.float32)

    model = ConditionalAdaptiveJAX()

    # Exact forward semantics: no inputs, returns None.
    assert model.forward() is None

    # Fast path: base class has no compute -> identity with no kernel launch.
    y_fast = model.placeholder_feature_pass(x)
    assert y_fast is x

    # Exercise the Pallas fusion-point kernel once (donated + aliased copy)
    # on a dedicated buffer so donation does not invalidate `x`.
    x_kernel = jnp.array(x, copy=True)
    y = jax.block_until_ready(_pallas_feature_stage(x_kernel))

    # Identity semantics check for the placeholder stage.
    assert y.shape == x.shape and y.dtype == x.dtype
    assert bool(jnp.allclose(y, x))

    print("KERNEL_OK")
</pallas_src>

<mosaic_0001>
module attributes {stable_mosaic.version = 11 : i64} {
  func.func @_copy_kernel(%arg0: i32, %arg1: i32, %arg2: memref<8x256xf32, #tpu.memory_space<vmem>>, %arg3: memref<8x256xf32, #tpu.memory_space<vmem>>) attributes {dimension_semantics = [#tpu.dimension_semantics<parallel>, #tpu.dimension_semantics<parallel>], iteration_bounds = array<i64: 1, 1>, scalar_prefetch = 0 : i64, scratch_operands = 0 : i64, tpu.core_type = #tpu.core_type<tc>, window_params = [{transform_indices = @transform_0, window_bounds = array<i64: 8, 256>}, {transform_indices = @transform_1, window_bounds = array<i64: 8, 256>}]} {
    %c0 = arith.constant 0 : index
    %c0_0 = arith.constant 0 : index
    %0 = vector.load %arg2[%c0, %c0_0] : memref<8x256xf32, #tpu.memory_space<vmem>>, vector<8x256xf32>
    %c0_1 = arith.constant 0 : index
    %c0_2 = arith.constant 0 : index
    %1 = vector.load %arg3[%c0_1, %c0_2] : memref<8x256xf32, #tpu.memory_space<vmem>>, vector<8x256xf32>
    tpu.vector_store %arg3[%c0_1, %c0_2], %0 {strides = array<i32>} : memref<8x256xf32, #tpu.memory_space<vmem>>, vector<8x256xf32>,
    return
  }
  func.func @transform_0(%arg0: i32, %arg1: i32) -> (i32, i32) {
    %c0_i32 = arith.constant 0 : i32
    return %arg0, %arg1 : i32, i32
  }
  func.func @transform_1(%arg0: i32, %arg1: i32) -> (i32, i32) {
    %c0_i32 = arith.constant 0 : i32
    return %arg0, %arg1 : i32, i32
  }
}

</mosaic_0001>

<llo_original>
// kernel: _pallas_feature_stage.1
$region0: #{_pallas_feature_stage.1}
  #allocation0 [shape = 'u32[]', space=smem, size = 0x4, offset = 0x4, fixed_abs, tag = 'smem constant byte address 0x4 - core index']
  #allocation1 [shape = 'u32[72,128]{1,0:T(1,128)}', space=vmem, size = 0x9000, scoped, tag = 'internal scratch']
  %s0 = inlined_call_operand.vmem [shape: f32[8,256], index: 0, kind: input, shape index: {}, may-alias: {0,1}]
  %s1 = inlined_call_operand.vmem [shape: f32[8,256], index: 1, kind: output, shape index: {}, may-alias: {0,1}]
  %s2 = sld [smem:[#allocation0]]
  $region14: #{_pallas_feature_stage.1} parent=0
    _
  %s4 = ssub.s32 1, %s2
  %s5 = scalar_select 0, %s4, %s2
  // Predicated region
  $region2: #{_pallas_feature_stage.1} parent=0 // pred_check
    _
  $region3: #{_pallas_feature_stage.1} parent=0 // pred_check_branch
    %7 = sbr.rel (0) target = $region5
  $region4: #{_pallas_feature_stage.1} parent=0 // pred_region
    _
  $region5: #{_pallas_feature_stage.1} parent=0 // pred_fallthru
    _
  %v8 = vld [vmem:[%s0] sm:$0xff]
  %v9 = vld [vmem:[%s0 + $0x8] sm:$0xff]
  %10 = vst [vmem:[%s1] sm:$0xff] %v8
  %11 = vst [vmem:[%s1 + $0x8] sm:$0xff] %v9
  // Predicated region
  $region6: #{_pallas_feature_stage.1} parent=0 // pred_check
    _
  $region7: #{_pallas_feature_stage.1} parent=0 // pred_check_branch
    %13 = sbr.rel (0) target = $region9
  $region8: #{_pallas_feature_stage.1} parent=0 // pred_region
    _
  $region9: #{_pallas_feature_stage.1} parent=0 // pred_fallthru
    _
  // Predicated region
  $region10: #{_pallas_feature_stage.1} parent=0 // pred_check
    _
  $region11: #{_pallas_feature_stage.1} parent=0 // pred_check_branch
    %15 = sbr.rel (0) target = $region13
  $region12: #{_pallas_feature_stage.1} parent=0 // pred_region
    _
  $region13: #{_pallas_feature_stage.1} parent=0 // pred_fallthru
    _

</llo_original>
